<compile_context>
chip_gen: v7x
topology: tpu7x:2x2x1
jax: 0.10.0
libtpu: 0.0.40
codegen_flags: <defaults>
</compile_context>

<pallas_src>
import numpy as np
import jax
import jax.numpy as jnp
from jax.experimental import pallas as pl
from jax.experimental.pallas import tpu as pltpu


# ----------------------------------------------------------------------------
# Deterministic parameter / table setup (plain numpy glue, mirrors __init__)
# ----------------------------------------------------------------------------
def make_sqrt_eig(nlat, alpha=2.0, tau=3.0, sigma=None, radius=1.0):
    if sigma is None:
        assert alpha > 1.0
        sigma = tau ** (0.5 * (2 * alpha - 2.0))
    j = np.arange(nlat, dtype=np.float64)
    eig = np.repeat((j * (j + 1))[:, None], nlat + 1, axis=1)        # (nlat, nlat+1)
    se = sigma * (eig / radius ** 2 + tau ** 2) ** (-alpha / 2.0)
    se = np.tril(se)
    se[0, 0] = 0.0
    return se.astype(np.float32)                                      # (lmax, mmax)


def make_legendre_pct(mmax, lmax, nlat):
    """Orthonormal associated Legendre functions on the equiangular latitude nodes,
    Condon-Shortley phase, with torch_harmonics' inverse/'backward' normalization.
    Returns pct of shape (mmax, lmax, nlat)."""
    tj = np.pi * np.arange(nlat) / (nlat - 1)
    t = np.flip(tj)
    x = np.cos(t)
    nmax = max(mmax, lmax)
    vdm = np.zeros((nmax, nmax, nlat), dtype=np.float64)
    norm_factor = 1.0 / np.sqrt(4.0 * np.pi)
    vdm[0, 0, :] = norm_factor / np.sqrt(4.0 * np.pi)
    for l in range(1, nmax):
        vdm[l - 1, l, :] = np.sqrt(2 * l + 1) * x * vdm[l - 1, l - 1, :]
        vdm[l, l, :] = np.sqrt((2 * l + 1) * (1 + x) * (1 - x) / (2 * l)) * vdm[l - 1, l - 1, :]
    for l in range(2, nmax):
        for m in range(0, l - 1):
            vdm[m, l, :] = (
                x * np.sqrt((2 * l - 1) / (l - m) * (2 * l + 1) / (l + m)) * vdm[m, l - 1, :]
                - np.sqrt((l + m - 1) / (l - m) * (2 * l + 1) / (2 * l - 3)
                          * (l - m - 1) / (l + m)) * vdm[m, l - 2, :]
            )
    vdm = vdm[:mmax, :lmax]
    for m in range(1, mmax, 2):
        vdm[m] *= -1.0
    return vdm.astype(np.float32)                                     # (mmax, lmax, nlat)


def make_irfft_matrices(nlon):
    """Real matrices A, B of shape (mmax, nlon) such that
    irfft(c, n=nlon, norm='forward')[j] = sum_m Re(c[m])*A[m,j] - Im(c[m])*B[m,j]."""
    assert nlon % 2 == 0, "Nyquist weighting assumes even nlon (nlon = 2*nlat)"
    mmax = nlon // 2 + 1
    m = np.arange(mmax, dtype=np.float64)[:, None]
    j = np.arange(nlon, dtype=np.float64)[None, :]
    ang = 2.0 * np.pi * m * j / nlon
    w = np.full((mmax, 1), 2.0)
    w[0, 0] = 1.0
    w[-1, 0] = 1.0
    A = (w * np.cos(ang)).astype(np.float32)
    B = (w * np.sin(ang)).astype(np.float32)
    return A, B


def build_tables(nlat, alpha=2.0, tau=3.0, sigma=None, radius=1.0, tm=8):
    """Host-side precompute: fold sqrt_eig into the Legendre tables, pad the m axis
    to a multiple of tm, and build the interleaved inverse-real-DFT matrix."""
    nlon = 2 * nlat
    mmax = nlat + 1
    lmax = nlat
    mmax_p = ((mmax + tm - 1) // tm) * tm

    sqrt_eig = make_sqrt_eig(nlat, alpha, tau, sigma, radius)     # (lmax, mmax)
    pct = make_legendre_pct(mmax, lmax, nlat)                     # (mmax, lmax, nlat)
    A, B = make_irfft_matrices(nlon)                              # (mmax, nlon) each

    # fold sqrt_eig into the Legendre tables; zero-pad the m axis (padded modes -> 0)
    pct_scaled = np.zeros((mmax_p, lmax, nlat), dtype=np.float32)
    pct_scaled[:mmax] = pct * np.transpose(sqrt_eig)[:, :, None]

    # interleaved inverse-real-DFT matrix W (nlon, 2*mmax_p):
    #   column 2m   <-  A[m, :]   (multiplies Re(c_m))
    #   column 2m+1 <- -B[m, :]   (multiplies Im(c_m))
    # padded columns stay zero.
    W = np.zeros((nlon, 2 * mmax_p), dtype=np.float32)
    W[:, 0:2 * mmax:2] = A.T
    W[:, 1:2 * mmax:2] = -B.T

    return sqrt_eig, pct, pct_scaled, W, mmax, mmax_p, lmax, nlon


# ----------------------------------------------------------------------------
# Pallas kernels
# ----------------------------------------------------------------------------
def _legendre_kernel(x_ref, p_ref, c_ref):
    # x_ref: (TM, 2N, lmax)  p_ref: (TM, lmax, nlat)  c_ref: (TM, 2N, nlat)
    # single batched MXU matmul per m-block; re/im fused along the M (sublane) dim.
    c_ref[...] = jnp.einsum(
        "mnl,mlk->mnk", x_ref[...], p_ref[...],
        preferred_element_type=jnp.float32)


def _idft_kernel(w_ref, c_ref, o_ref):
    # o = W @ C : (nlon, 2*mmax_p) @ (2*mmax_p, TC) -> (nlon, TC)
    o_ref[...] = jnp.dot(w_ref[...], c_ref[...],
                         preferred_element_type=jnp.float32)


# ----------------------------------------------------------------------------
# Forward wrapper
# ----------------------------------------------------------------------------
def grf_s2_forward(x, pct_scaled, W, N, nlat, nlon, *, tm=8, tc=None):
    """x: (mmax_p, 2N, lmax) float32 noise, m-major; rows [0,N) = Re, [N,2N) = Im.
    Returns u: (N, nlat, nlon) float32 (same as the PyTorch module's output)."""
    mmax_p, twoN, lmax = x.shape
    assert twoN == 2 * N and lmax == nlat
    assert mmax_p % tm == 0
    kp = 2 * mmax_p
    rows = N * nlat

    # ---- stage 1: Legendre synthesis, TM modes per grid step --------------------
    c = pl.pallas_call(
        _legendre_kernel,
        out_shape=jax.ShapeDtypeStruct((mmax_p, 2 * N, nlat), jnp.float32),
        grid_spec=pltpu.PrefetchScalarGridSpec(
            num_scalar_prefetch=0,
            grid=(mmax_p // tm,),
            in_specs=[
                pl.BlockSpec((tm, 2 * N, lmax), lambda m: (m, 0, 0)),
                pl.BlockSpec((tm, lmax, nlat), lambda m: (m, 0, 0)),
            ],
            out_specs=pl.BlockSpec((tm, 2 * N, nlat), lambda m: (m, 0, 0)),
        ),
        compiler_params=pltpu.CompilerParams(
            dimension_semantics=("parallel",)),
    )(x, pct_scaled)

    # Free, contiguous reshape: (mmax_p, 2N, nlat) -> (2*mmax_p, N*nlat)
    # row 2m+0 holds Re(c_m) for all (n,k), row 2m+1 holds Im(c_m) -- matches W.
    C = c.reshape(kp, rows)

    # ---- stage 2: inverse real DFT as one column-tiled matmul -------------------
    if tc is None:
        tc = rows if rows <= 512 else next(
            (t for t in (512, 384, 256, 128) if rows % t == 0), rows)

    u_t = pl.pallas_call(
        _idft_kernel,
        out_shape=jax.ShapeDtypeStruct((nlon, rows), jnp.float32),
        grid_spec=pltpu.PrefetchScalarGridSpec(
            num_scalar_prefetch=0,
            grid=(rows // tc,),
            in_specs=[
                pl.BlockSpec((nlon, kp), lambda j: (0, 0)),   # W stays VMEM-resident
                pl.BlockSpec((kp, tc), lambda j: (0, j)),
            ],
            out_specs=pl.BlockSpec((nlon, tc), lambda j: (0, j)),
        ),
        compiler_params=pltpu.CompilerParams(
            dimension_semantics=("parallel",)),
    )(W, C)

    # Only remaining XLA transpose: (nlon, N*nlat) -> (N, nlat, nlon)
    return jnp.transpose(u_t, (1, 0)).reshape(N, nlat, nlon)


# ----------------------------------------------------------------------------
if __name__ == "__main__":
    nlat = 8                       # small: output grid (N, 8, 16)
    N = 2
    TM = 8

    sqrt_eig_np, pct_np, pct_scaled_np, W_np, mmax, mmax_p, lmax, nlon = build_tables(
        nlat, tm=TM)
    pct_scaled = jnp.asarray(pct_scaled_np)    # (mmax_p, lmax, nlat)
    W = jnp.asarray(W_np)                      # (nlon, 2*mmax_p)

    # Complex standard-normal noise generated directly in the kernel's m-major
    # layout (mmax_p, 2N, lmax); rows [0,N)=Re, [N,2N)=Im for each mode m.
    # Padded modes m >= mmax hit zero tables, so they contribute nothing.
    key = jax.random.PRNGKey(0)
    x = jax.random.normal(key, (mmax_p, 2 * N, lmax), dtype=jnp.float32)

    u = grf_s2_forward(x, pct_scaled, W, N, nlat, nlon, tm=TM)
    u = jax.block_until_ready(u)
    assert u.shape == (N, nlat, 2 * nlat) and u.dtype == jnp.float32

    # Pure-JAX reference of the same forward (complex einsum + irfft), for sanity.
    xi_re = jnp.transpose(x[:mmax, :N, :], (1, 2, 0))     # (N, lmax, mmax)
    xi_im = jnp.transpose(x[:mmax, N:, :], (1, 2, 0))
    xs = (xi_re + 1j * xi_im) * jnp.asarray(sqrt_eig_np)  # (N, lmax, mmax)
    c_ref = jnp.einsum("nlm,mlk->nkm", xs, jnp.asarray(pct_np).astype(jnp.complex64))
    u_ref = jnp.fft.irfft(c_ref, n=nlon, axis=-1, norm="forward").astype(jnp.float32)
    np.testing.assert_allclose(np.asarray(u), np.asarray(u_ref), atol=1e-4, rtol=1e-3)

    print("KERNEL_OK")
</pallas_src>

<mosaic_0001>
module attributes {stable_mosaic.version = 11 : i64} {
  func.func @_legendre_kernel(%arg0: i32, %arg1: memref<8x4x8xf32, #tpu.memory_space<vmem>>, %arg2: memref<8x8x8xf32, #tpu.memory_space<vmem>>, %arg3: memref<8x4x8xf32, #tpu.memory_space<vmem>>) attributes {dimension_semantics = [#tpu.dimension_semantics<parallel>], iteration_bounds = array<i64: 2>, scalar_prefetch = 0 : i64, scratch_operands = 0 : i64, tpu.core_type = #tpu.core_type<tc>, window_params = [{transform_indices = @transform_0, window_bounds = array<i64: 8, 4, 8>}, {transform_indices = @transform_1, window_bounds = array<i64: 8, 8, 8>}, {transform_indices = @transform_2, window_bounds = array<i64: 8, 4, 8>}]} {
    %c0 = arith.constant 0 : index
    %c0_0 = arith.constant 0 : index
    %c0_1 = arith.constant 0 : index
    %0 = vector.load %arg1[%c0, %c0_0, %c0_1] : memref<8x4x8xf32, #tpu.memory_space<vmem>>, vector<8x4x8xf32>
    %c0_2 = arith.constant 0 : index
    %c0_3 = arith.constant 0 : index
    %c0_4 = arith.constant 0 : index
    %1 = vector.load %arg2[%c0_2, %c0_3, %c0_4] : memref<8x8x8xf32, #tpu.memory_space<vmem>>, vector<8x8x8xf32>
    "tpu.trace_start"() <{level = 10 : i32, message = "mnl,mlk->mnk"}> : () -> ()
    %cst = arith.constant dense<0.000000e+00> : vector<8x4x8xf32>
    %2 = tpu.matmul %0, %1, %cst {dimension_numbers = #tpu.dot_dimension_numbers<[2], [1], [1], [2], [0, 0, 0, 1, 1, 2], [0], [0]>} : vector<8x4x8xf32>, vector<8x8x8xf32>, vector<8x4x8xf32> -> vector<8x4x8xf32>
    "tpu.trace_stop"() : () -> ()
    %c0_5 = arith.constant 0 : index
    %c0_6 = arith.constant 0 : index
    %c0_7 = arith.constant 0 : index
    %3 = vector.load %arg3[%c0_5, %c0_6, %c0_7] : memref<8x4x8xf32, #tpu.memory_space<vmem>>, vector<8x4x8xf32>
    tpu.vector_store %arg3[%c0_5, %c0_6, %c0_7], %2 {strides = array<i32>} : memref<8x4x8xf32, #tpu.memory_space<vmem>>, vector<8x4x8xf32>,
    return
  }
  func.func @transform_0(%arg0: i32) -> (i32, i32, i32) {
    %c0_i32 = arith.constant 0 : i32
    %c0_i32_0 = arith.constant 0 : i32
    %c0_i32_1 = arith.constant 0 : i32
    return %arg0, %c0_i32, %c0_i32_0 : i32, i32, i32
  }
  func.func @transform_1(%arg0: i32) -> (i32, i32, i32) {
    %c0_i32 = arith.constant 0 : i32
    %c0_i32_0 = arith.constant 0 : i32
    %c0_i32_1 = arith.constant 0 : i32
    return %arg0, %c0_i32, %c0_i32_0 : i32, i32, i32
  }
  func.func @transform_2(%arg0: i32) -> (i32, i32, i32) {
    %c0_i32 = arith.constant 0 : i32
    %c0_i32_0 = arith.constant 0 : i32
    %c0_i32_1 = arith.constant 0 : i32
    return %arg0, %c0_i32, %c0_i32_0 : i32, i32, i32
  }
}

</mosaic_0001>

<llo_original>
// kernel: tpu_custom_call.1
$region0: #{tpu_custom_call.1}
  #allocation0 [shape = 'u32[]', space=smem, size = 0x4, offset = 0x4, fixed_abs, tag = 'smem constant byte address 0x4 - core index']
  #allocation1 [shape = 'u32[144,128]{1,0:T(1,128)}', space=vmem, size = 0x12000, scoped, tag = 'internal scratch']
  %s0 = inlined_call_operand.vmem [shape: f32[16,4,8], index: 0, kind: input, shape index: {}]
  %s1 = inlined_call_operand.vmem [shape: f32[16,8,8], index: 1, kind: input, shape index: {}]
  %s2 = inlined_call_operand.vmem [shape: f32[16,4,8], index: 2, kind: output, shape index: {}]
  %s3 = sld [smem:[#allocation0]]
  $region41: #{tpu_custom_call.1} parent=0
    _
  %s5 = ssub.s32 1, %s3
  %s6 = scalar_select 0, %s5, %s3
  loop: start=0, step=1, limit=4
  $region2: #{tpu_custom_call.1} parent=0 // loop_pre_header
    _
  $region3: #{tpu_custom_call.1} parent=0 // loop_header
    %s8 = sphi 0, %s12
    %p9 = scmp.ge.s32.totalorder %s8, 4
    %s18 = sphi 0, %s20
    %s21 = sphi 0, %s18
    %s22 = sphi 0, %s21
    %s38 = sphi 0, %s22
    %s44 = sphi 0, %s46
    %s47 = sphi 0, %s44
    %s48 = sphi 0, %s47
    %s64 = sphi 0, %s48
    %s70 = sphi 0, %s72
    %s73 = sphi 0, %s70
    %s74 = sphi 0, %s73
    %s90 = sphi 0, %s74
  $region4: #{tpu_custom_call.1} parent=0 // loop_header_branch
    %11 = sbr.rel (%p9) target = $region8
  $region5: #{tpu_custom_call.1} parent=0 // loop_body
    %s13 = ssub.s32 %s8, 1
    %s14 = ssub.s32 %s8, 2
    %s15 = sadd.s32 %s8, 1
    %s16 = ssub.s32 %s8, %s15
    %p17 = scmp.eq.s32.totalorder %s16, 0
    %s19 = sadd.s32 %s18, 1
    %s20 = scalar_select %p17, %s18, %s19
    %p23 = pneg %p17
    %p24 = scmp.eq.s32.totalorder %s8, 1
    %p25 = por %p23, %p24
    %p26 = scmp.ne.s32.totalorder %s18, %s21
    %p27 = scmp.eq.s32.totalorder %s8, 0
    %p28 = por %p26, %p27
    %p29 = scmp.ne.s32.totalorder %s18, %s21
    %p30 = scmp.eq.s32.totalorder %s13, 1
    %p31 = por %p29, %p30
    %p32 = scmp.ne.s32.totalorder %s21, %s22
    %p33 = scmp.eq.s32.totalorder %s13, 0
    %p34 = por %p32, %p33
    %p35 = scmp.ne.s32.totalorder %s21, %s22
    %p36 = scmp.eq.s32.totalorder %s14, 1
    %p37 = por %p35, %p36
    %p39 = scmp.ne.s32.totalorder %s22, %s38
    %p40 = scmp.eq.s32.totalorder %s14, 0
    %p41 = por %p39, %p40
    %s42 = ssub.s32 %s8, %s15
    %p43 = scmp.eq.s32.totalorder %s42, 0
    %s45 = sadd.s32 %s44, 1
    %s46 = scalar_select %p43, %s44, %s45
    %p49 = pneg %p43
    %p50 = scmp.eq.s32.totalorder %s8, 1
    %p51 = por %p49, %p50
    %p52 = scmp.ne.s32.totalorder %s44, %s47
    %p53 = scmp.eq.s32.totalorder %s8, 0
    %p54 = por %p52, %p53
    %p55 = scmp.ne.s32.totalorder %s44, %s47
    %p56 = scmp.eq.s32.totalorder %s13, 1
    %p57 = por %p55, %p56
    %p58 = scmp.ne.s32.totalorder %s47, %s48
    %p59 = scmp.eq.s32.totalorder %s13, 0
    %p60 = por %p58, %p59
    %p61 = scmp.ne.s32.totalorder %s47, %s48
    %p62 = scmp.eq.s32.totalorder %s14, 1
    %p63 = por %p61, %p62
    %p65 = scmp.ne.s32.totalorder %s48, %s64
    %p66 = scmp.eq.s32.totalorder %s14, 0
    %p67 = por %p65, %p66
    %s68 = ssub.s32 %s8, %s15
    %p69 = scmp.eq.s32.totalorder %s68, 0
    %s71 = sadd.s32 %s70, 1
    %s72 = scalar_select %p69, %s70, %s71
    %p75 = pneg %p69
    %p76 = scmp.eq.s32.totalorder %s8, 1
    %p77 = por %p75, %p76
    %p78 = scmp.ne.s32.totalorder %s70, %s73
    %p79 = scmp.eq.s32.totalorder %s8, 0
    %p80 = por %p78, %p79
    %p81 = scmp.ne.s32.totalorder %s70, %s73
    %p82 = scmp.eq.s32.totalorder %s13, 1
    %p83 = por %p81, %p82
    %p84 = scmp.ne.s32.totalorder %s73, %s74
    %p85 = scmp.eq.s32.totalorder %s13, 0
    %p86 = por %p84, %p85
    %p87 = scmp.ne.s32.totalorder %s73, %s74
    %p88 = scmp.eq.s32.totalorder %s14, 1
    %p89 = por %p87, %p88
    %p91 = scmp.ne.s32.totalorder %s74, %s90
    %p92 = scmp.eq.s32.totalorder %s14, 0
    %p93 = por %p91, %p92
    %p94 = scmp.le.s32.totalorder 1, %s8
    %p95 = scmp.lt.s32.totalorder %s8, 3
    %p96 = pnand %p94, %p95
    %p97 = pneg %p96
    // Predicated region
    $region9: #{tpu_custom_call.1} parent=5 // pred_check
      _
    $region10: #{tpu_custom_call.1} parent=5 // pred_check_branch
      %99 = sbr.rel (%p96) target = $region12
    $region11: #{tpu_custom_call.1} parent=5 // pred_region
      %s100 = ssub.s32 %s8, 1
    $region12: #{tpu_custom_call.1} parent=5 // pred_fallthru
      _
    %p101 = scmp.lt.s32.totalorder %s8, 2
    // Predicated region
    $region13: #{tpu_custom_call.1} parent=5 // pred_check
      %p102 = pneg %p101
    $region14: #{tpu_custom_call.1} parent=5 // pred_check_branch
      %104 = sbr.rel (%p102) target = $region16
    $region15: #{tpu_custom_call.1} parent=5 // pred_region
      // Predicated region
      $region17: #{tpu_custom_call.1} parent=15 // pred_check
        %p105 = pneg %p28
      $region18: #{tpu_custom_call.1} parent=15 // pred_check_branch
        %107 = sbr.rel (%p105) target = $region20
      $region19: #{tpu_custom_call.1} parent=15 // pred_region
        %s108 = smul.u32 8, %s8
        %p109 = scmp.lt.s32.totalorder %s108, 15
        %s110 = scalar_select %p109, %s108, 15
        %s111 = smul.addr %s110, 4
        %s112 = scalar_lea.vmem %s0, %s111
        %s113 = smul.u32 8, %s8
      $region20: #{tpu_custom_call.1} parent=15 // pred_fallthru
        _
      // Predicated region
      $region21: #{tpu_custom_call.1} parent=15 // pred_check
        %p114 = pneg %p54
      $region22: #{tpu_custom_call.1} parent=15 // pred_check_branch
        %116 = sbr.rel (%p114) target = $region24
      $region23: #{tpu_custom_call.1} parent=15 // pred_region
        %s117 = smul.u32 8, %s8
        %p118 = scmp.lt.s32.totalorder %s117, 15
        %s119 = scalar_select %p118, %s117, 15
        %s120 = smul.addr %s119, 8
        %s121 = scalar_lea.vmem %s1, %s120
        %s122 = smul.u32 8, %s8
      $region24: #{tpu_custom_call.1} parent=15 // pred_fallthru
        _
    $region16: #{tpu_custom_call.1} parent=5 // pred_fallthru
      _
    %p123 = scmp.le.s32.totalorder 1, %s8
    %p124 = scmp.lt.s32.totalorder %s8, 3
    %p125 = pnand %p123, %p124
    %p126 = pneg %p125
    // Predicated region
    $region25: #{tpu_custom_call.1} parent=5 // pred_check
      _
    $region26: #{tpu_custom_call.1} parent=5 // pred_check_branch
      %128 = sbr.rel (%p125) target = $region28
    $region27: #{tpu_custom_call.1} parent=5 // pred_region
      %s129 = ssub.s32 %s8, 1
      %s130 = smul.u32 8, %s13
      %p131 = scmp.lt.s32.totalorder %s130, 15
      %s132 = scalar_select %p131, %s130, 15
      %s133 = smul.addr %s132, 4
      %s134 = scalar_lea.vmem %s0, %s133
      %p135 = pneg %p34
      %p136 = pneg %p31
      %s137 = smul.u32 8, %s13
      %p138 = scmp.lt.s32.totalorder %s137, 15
      %s139 = scalar_select %p138, %s137, 15
      %s140 = smul.addr %s139, 8
      %s141 = scalar_lea.vmem %s1, %s140
      %p142 = pneg %p60
      %p143 = pneg %p57
      %p144 = pneg %p86
      %p145 = pneg %p83
      %s146 = smul.u32 8, %s13
      %p147 = scmp.lt.s32.totalorder %s146, 15
      %s148 = scalar_select %p147, %s146, 15
      %s149 = smul.addr %s148, 4
      %s150 = scalar_lea.vmem %s2, %s149
      %s151 = smul.u32 8, %s13
      %p152 = scmp.lt.s32.totalorder %s151, 15
      %s153 = scalar_select %p152, %s151, 15
      %s154 = smul.addr %s153, 4
      %s155 = scalar_lea.vmem %s0, %s154
      %s156 = smul.u32 8, %s13
      %s157 = smul.u32 8, %s13
      %p158 = scmp.lt.s32.totalorder %s157, 15
      %s159 = scalar_select %p158, %s157, 15
      %s160 = smul.addr %s159, 8
      %s161 = scalar_lea.vmem %s1, %s160
      %s162 = smul.u32 8, %s13
      %s163 = smul.u32 8, %s13
      %p164 = scmp.lt.s32.totalorder %s163, 15
      %s165 = scalar_select %p164, %s163, 15
      %s166 = smul.addr %s165, 4
      %s167 = scalar_lea.vmem %s2, %s166
      %s168 = smul.u32 8, %s13
      %v169 = vld [vmem:[%s155] sm:$0xf]
      %v170 = vld [vmem:[%s155 + $0x4] sm:$0xf]
      %v171 = vld [vmem:[%s155 + $0x8] sm:$0xf]
      %v172 = vld [vmem:[%s155 + $0xc] sm:$0xf]
      %v173 = vld [vmem:[%s155 + $0x10] sm:$0xf]
      %v174 = vld [vmem:[%s155 + $0x14] sm:$0xf]
      %v175 = vld [vmem:[%s155 + $0x18] sm:$0xf]
      %v176 = vld [vmem:[%s155 + $0x1c] sm:$0xf]
      %v177 = vld [vmem:[%s161] sm:$0xff]
      %v178 = vld [vmem:[%s161 + $0x8] sm:$0xff]
      %v179 = vld [vmem:[%s161 + $0x10] sm:$0xff]
      %v180 = vld [vmem:[%s161 + $0x18] sm:$0xff]
      %v181 = vld [vmem:[%s161 + $0x20] sm:$0xff]
      %v182 = vld [vmem:[%s161 + $0x28] sm:$0xff]
      %v183 = vld [vmem:[%s161 + $0x30] sm:$0xff]
      %v184 = vld [vmem:[%s161 + $0x38] sm:$0xff]
      %vm185 = vcmask 64512
      %v187 = vsel %vm185, %v169, 0
      %189 = vmatprep.subr.mxu0 0.0
      %190 = vmatpush1.msra.mxu0 %v177
      %191 = vmatprep.subr.mxu0 0.0
      %192 = vmatpush1.msra.mxu0 0.0
      %193 = vmatprep.subr.mxu0 0.0
      %194 = vmatpush1.msra.mxu0 0.0
      %195 = vmatprep.subr.mxu0 0.0
      %196 = vmatpush1.msra.mxu0 0.0
      %197 = vmatprep.subr.mxu0 0.0
      %198 = vmatpush1.msra.mxu0 0.0
      %199 = vmatprep.subr.mxu0 0.0
      %200 = vmatpush1.msra.mxu0 0.0
      %201 = vmatprep.subr.mxu0 0.0
      %202 = vmatpush1.msra.mxu0 0.0
      %203 = vmatprep.subr.mxu0 0.0
      %204 = vmatpush1.msra.mxu0 0.0
      %205 = vmatprep.subr.mxu0 0.0
      %206 = vmatpush1.msra.mxu0 0.0
      %207 = vmatprep.subr.mxu0 0.0
      %208 = vmatpush1.msra.mxu0 0.0
      %209 = vmatprep.subr.mxu0 0.0
      %210 = vmatpush1.msra.mxu0 0.0
      %211 = vmatprep.subr.mxu0 0.0
      %212 = vmatpush1.msra.mxu0 0.0
      %213 = vmatprep.subr.mxu0 0.0
      %214 = vmatpush1.msra.mxu0 0.0
      %215 = vmatprep.subr.mxu0 0.0
      %216 = vmatpush1.msra.mxu0 0.0
      %217 = vmatprep.subr.mxu0 0.0
      %218 = vmatpush1.msra.mxu0 0.0
      %219 = vmatprep.subr.mxu0 0.0
      %220 = vmatpush1.msra.mxu0 0.0
      %221 = vmatprep.subr.mxu0 0.0
      %222 = vmatpush1.msra.mxu0 0.0
      %223 = vmatprep.subr.mxu0 0.0
      %224 = vmatpush1.msra.mxu0 0.0
      %225 = vmatprep.subr.mxu0 0.0
      %226 = vmatpush1.msra.mxu0 0.0
      %227 = vmatprep.subr.mxu0 0.0
      %228 = vmatpush1.msra.mxu0 0.0
      %229 = vmatprep.subr.mxu0 0.0
      %230 = vmatpush1.msra.mxu0 0.0
      %231 = vmatprep.subr.mxu0 0.0
      %232 = vmatpush1.msra.mxu0 0.0
      %233 = vmatprep.subr.mxu0 0.0
      %234 = vmatpush1.msra.mxu0 0.0
      %235 = vmatprep.subr.mxu0 0.0
      %236 = vmatpush1.msra.mxu0 0.0
      %237 = vmatprep.subr.mxu0 0.0
      %238 = vmatpush1.msra.mxu0 0.0
      %239 = vmatprep.subr.mxu0 0.0
      %240 = vmatpush1.msra.mxu0 0.0
      %241 = vmatprep.subr.mxu0 0.0
      %242 = vmatpush1.msra.mxu0 0.0
      %243 = vmatprep.subr.mxu0 0.0
      %244 = vmatpush1.msra.mxu0 0.0
      %245 = vmatprep.subr.mxu0 0.0
      %246 = vmatpush1.msra.mxu0 0.0
      %247 = vmatprep.subr.mxu0 0.0
      %248 = vmatpush1.msra.mxu0 0.0
      %249 = vmatprep.subr.mxu0 0.0
      %250 = vmatpush1.msra.mxu0 0.0
      %251 = vmatprep.subr.mxu0 0.0
      %252 = vmatpush1.msra.mxu0 0.0
      %253 = vmatprep.mubr.f32.mxu0 0.0
      %254 = vmatmul.mubr.f32.gmra.mrb[0].mxu0 %v187
      %v255 = vpop.f32.mrb[0].mxu0
      %v256 = vadd.f32 0.0, %v255
      %v257 = vpop.f32.mrb[0].mxu0
      %258 = vdwg.mxu0
      %v260 = vsel %vm185, %v170, 0
      %262 = vmatprep.subr.mxu0 0.0
      %263 = vmatpush1.msra.mxu0 %v178
      %264 = vmatprep.subr.mxu0 0.0
      %265 = vmatpush1.msra.mxu0 0.0
      %266 = vmatprep.subr.mxu0 0.0
      %267 = vmatpush1.msra.mxu0 0.0
      %268 = vmatprep.subr.mxu0 0.0
      %269 = vmatpush1.msra.mxu0 0.0
      %270 = vmatprep.subr.mxu0 0.0
      %271 = vmatpush1.msra.mxu0 0.0
      %272 = vmatprep.subr.mxu0 0.0
      %273 = vmatpush1.msra.mxu0 0.0
      %274 = vmatprep.subr.mxu0 0.0
      %275 = vmatpush1.msra.mxu0 0.0
      %276 = vmatprep.subr.mxu0 0.0
      %277 = vmatpush1.msra.mxu0 0.0
      %278 = vmatprep.subr.mxu0 0.0
      %279 = vmatpush1.msra.mxu0 0.0
      %280 = vmatprep.subr.mxu0 0.0
      %281 = vmatpush1.msra.mxu0 0.0
      %282 = vmatprep.subr.mxu0 0.0
      %283 = vmatpush1.msra.mxu0 0.0
      %284 = vmatprep.subr.mxu0 0.0
      %285 = vmatpush1.msra.mxu0 0.0
      %286 = vmatprep.subr.mxu0 0.0
      %287 = vmatpush1.msra.mxu0 0.0
      %288 = vmatprep.subr.mxu0 0.0
      %289 = vmatpush1.msra.mxu0 0.0
      %290 = vmatprep.subr.mxu0 0.0
      %291 = vmatpush1.msra.mxu0 0.0
      %292 = vmatprep.subr.mxu0 0.0
      %293 = vmatpush1.msra.mxu0 0.0
      %294 = vmatprep.subr.mxu0 0.0
      %295 = vmatpush1.msra.mxu0 0.0
      %296 = vmatprep.subr.mxu0 0.0
      %297 = vmatpush1.msra.mxu0 0.0
      %298 = vmatprep.subr.mxu0 0.0
      %299 = vmatpush1.msra.mxu0 0.0
      %300 = vmatprep.subr.mxu0 0.0
      %301 = vmatpush1.msra.mxu0 0.0
      %302 = vmatprep.subr.mxu0 0.0
      %303 = vmatpush1.msra.mxu0 0.0
      %304 = vmatprep.subr.mxu0 0.0
      %305 = vmatpush1.msra.mxu0 0.0
      %306 = vmatprep.subr.mxu0 0.0
      %307 = vmatpush1.msra.mxu0 0.0
      %308 = vmatprep.subr.mxu0 0.0
      %309 = vmatpush1.msra.mxu0 0.0
      %310 = vmatprep.subr.mxu0 0.0
      %311 = vmatpush1.msra.mxu0 0.0
      %312 = vmatprep.subr.mxu0 0.0
      %313 = vmatpush1.msra.mxu0 0.0
      %314 = vmatprep.subr.mxu0 0.0
      %315 = vmatpush1.msra.mxu0 0.0
      %316 = vmatprep.subr.mxu0 0.0
      %317 = vmatpush1.msra.mxu0 0.0
      %318 = vmatprep.subr.mxu0 0.0
      %319 = vmatpush1.msra.mxu0 0.0
      %320 = vmatprep.subr.mxu0 0.0
      %321 = vmatpush1.msra.mxu0 0.0
      %322 = vmatprep.subr.mxu0 0.0
      %323 = vmatpush1.msra.mxu0 0.0
      %324 = vmatprep.subr.mxu0 0.0
      %325 = vmatpush1.msra.mxu0 0.0
      %326 = vmatprep.mubr.f32.mxu0 0.0
      %327 = vmatmul.mubr.f32.gmra.mrb[0].mxu0 %v260
      %v328 = vpop.f32.mrb[0].mxu0
      %v329 = vadd.f32 0.0, %v328
      %v330 = vpop.f32.mrb[0].mxu0
      %331 = vdwg.mxu0
      %v333 = vsel %vm185, %v171, 0
      %335 = vmatprep.subr.mxu0 0.0
      %336 = vmatpush1.msra.mxu0 %v179
      %337 = vmatprep.subr.mxu0 0.0
      %338 = vmatpush1.msra.mxu0 0.0
      %339 = vmatprep.subr.mxu0 0.0
      %340 = vmatpush1.msra.mxu0 0.0
      %341 = vmatprep.subr.mxu0 0.0
      %342 = vmatpush1.msra.mxu0 0.0
      %343 = vmatprep.subr.mxu0 0.0
      %344 = vmatpush1.msra.mxu0 0.0
      %345 = vmatprep.subr.mxu0 0.0
      %346 = vmatpush1.msra.mxu0 0.0
      %347 = vmatprep.subr.mxu0 0.0
      %348 = vmatpush1.msra.mxu0 0.0
      %349 = vmatprep.subr.mxu0 0.0
      %350 = vmatpush1.msra.mxu0 0.0
      %351 = vmatprep.subr.mxu0 0.0
      %352 = vmatpush1.msra.mxu0 0.0
      %353 = vmatprep.subr.mxu0 0.0
      %354 = vmatpush1.msra.mxu0 0.0
      %355 = vmatprep.subr.mxu0 0.0
      %356 = vmatpush1.msra.mxu0 0.0
      %357 = vmatprep.subr.mxu0 0.0
      %358 = vmatpush1.msra.mxu0 0.0
      %359 = vmatprep.subr.mxu0 0.0
      %360 = vmatpush1.msra.mxu0 0.0
      %361 = vmatprep.subr.mxu0 0.0
      %362 = vmatpush1.msra.mxu0 0.0
      %363 = vmatprep.subr.mxu0 0.0
      %364 = vmatpush1.msra.mxu0 0.0
      %365 = vmatprep.subr.mxu0 0.0
      %366 = vmatpush1.msra.mxu0 0.0
      %367 = vmatprep.subr.mxu0 0.0
      %368 = vmatpush1.msra.mxu0 0.0
      %369 = vmatprep.subr.mxu0 0.0
      %370 = vmatpush1.msra.mxu0 0.0
      %371 = vmatprep.subr.mxu0 0.0
      %372 = vmatpush1.msra.mxu0 0.0
      %373 = vmatprep.subr.mxu0 0.0
      %374 = vmatpush1.msra.mxu0 0.0
      %375 = vmatprep.subr.mxu0 0.0
      %376 = vmatpush1.msra.mxu0 0.0
      %377 = vmatprep.subr.mxu0 0.0
      %378 = vmatpush1.msra.mxu0 0.0
      %379 = vmatprep.subr.mxu0 0.0
      %380 = vmatpush1.msra.mxu0 0.0
      %381 = vmatprep.subr.mxu0 0.0
      %382 = vmatpush1.msra.mxu0 0.0
      %383 = vmatprep.subr.mxu0 0.0
      %384 = vmatpush1.msra.mxu0 0.0
      %385 = vmatprep.subr.mxu0 0.0
      %386 = vmatpush1.msra.mxu0 0.0
      %387 = vmatprep.subr.mxu0 0.0
      %388 = vmatpush1.msra.mxu0 0.0
      %389 = vmatprep.subr.mxu0 0.0
      %390 = vmatpush1.msra.mxu0 0.0
      %391 = vmatprep.subr.mxu0 0.0
      %392 = vmatpush1.msra.mxu0 0.0
      %393 = vmatprep.subr.mxu0 0.0
      %394 = vmatpush1.msra.mxu0 0.0
      %395 = vmatprep.subr.mxu0 0.0
      %396 = vmatpush1.msra.mxu0 0.0
      %397 = vmatprep.subr.mxu0 0.0
      %398 = vmatpush1.msra.mxu0 0.0
      %399 = vmatprep.mubr.f32.mxu0 0.0
      %400 = vmatmul.mubr.f32.gmra.mrb[0].mxu0 %v333
      %v401 = vpop.f32.mrb[0].mxu0
      %v402 = vadd.f32 0.0, %v401
      %v403 = vpop.f32.mrb[0].mxu0
      %404 = vdwg.mxu0
      %v406 = vsel %vm185, %v172, 0
      %408 = vmatprep.subr.mxu0 0.0
      %409 = vmatpush1.msra.mxu0 %v180
      %410 = vmatprep.subr.mxu0 0.0
      %411 = vmatpush1.msra.mxu0 0.0
      %412 = vmatprep.subr.mxu0 0.0
      %413 = vmatpush1.msra.mxu0 0.0
      %414 = vmatprep.subr.mxu0 0.0
      %415 = vmatpush1.msra.mxu0 0.0
      %416 = vmatprep.subr.mxu0 0.0
      %417 = vmatpush1.msra.mxu0 0.0
      %418 = vmatprep.subr.mxu0 0.0
      %419 = vmatpush1.msra.mxu0 0.0
      %420 = vmatprep.subr.mxu0 0.0
      %421 = vmatpush1.msra.mxu0 0.0
      %422 = vmatprep.subr.mxu0 0.0
      %423 = vmatpush1.msra.mxu0 0.0
      %424 = vmatprep.subr.mxu0 0.0
      %425 = vmatpush1.msra.mxu0 0.0
      %426 = vmatprep.subr.mxu0 0.0
      %427 = vmatpush1.msra.mxu0 0.0
      %428 = vmatprep.subr.mxu0 0.0
      %429 = vmatpush1.msra.mxu0 0.0
      %430 = vmatprep.subr.mxu0 0.0
      %431 = vmatpush1.msra.mxu0 0.0
      %432 = vmatprep.subr.mxu0 0.0
      %433 = vmatpush1.msra.mxu0 0.0
      %434 = vmatprep.subr.mxu0 0.0
      %435 = vmatpush1.msra.mxu0 0.0
      %436 = vmatprep.subr.mxu0 0.0
      %437 = vmatpush1.msra.mxu0 0.0
      %438 = vmatprep.subr.mxu0 0.0
      %439 = vmatpush1.msra.mxu0 0.0
      %440 = vmatprep.subr.mxu0 0.0
      %441 = vmatpush1.msra.mxu0 0.0
      %442 = vmatprep.subr.mxu0 0.0
      %443 = vmatpush1.msra.mxu0 0.0
      %444 = vmatprep.subr.mxu0 0.0
      %445 = vmatpush1.msra.mxu0 0.0
      %446 = vmatprep.subr.mxu0 0.0
      %447 = vmatpush1.msra.mxu0 0.0
      %448 = vmatprep.subr.mxu0 0.0
      %449 = vmatpush1.msra.mxu0 0.0
      %450 = vmatprep.subr.mxu0 0.0
      %451 = vmatpush1.msra.mxu0 0.0
      %452 = vmatprep.subr.mxu0 0.0
      %453 = vmatpush1.msra.mxu0 0.0
      %454 = vmatprep.subr.mxu0 0.0
      %455 = vmatpush1.msra.mxu0 0.0
      %456 = vmatprep.subr.mxu0 0.0
      %457 = vmatpush1.msra.mxu0 0.0
      %458 = vmatprep.subr.mxu0 0.0
      %459 = vmatpush1.msra.mxu0 0.0
      %460 = vmatprep.subr.mxu0 0.0
      %461 = vmatpush1.msra.mxu0 0.0
      %462 = vmatprep.subr.mxu0 0.0
      %463 = vmatpush1.msra.mxu0 0.0
      %464 = vmatprep.subr.mxu0 0.0
      %465 = vmatpush1.msra.mxu0 0.0
      %466 = vmatprep.subr.mxu0 0.0
      %467 = vmatpush1.msra.mxu0 0.0
      %468 = vmatprep.subr.mxu0 0.0
      %469 = vmatpush1.msra.mxu0 0.0
      %470 = vmatprep.subr.mxu0 0.0
      %471 = vmatpush1.msra.mxu0 0.0
      %472 = vmatprep.mubr.f32.mxu0 0.0
      %473 = vmatmul.mubr.f32.gmra.mrb[0].mxu0 %v406
      %v474 = vpop.f32.mrb[0].mxu0
      %v475 = vadd.f32 0.0, %v474
      %v476 = vpop.f32.mrb[0].mxu0
      %477 = vdwg.mxu0
      %v479 = vsel %vm185, %v173, 0
      %481 = vmatprep.subr.mxu0 0.0
      %482 = vmatpush1.msra.mxu0 %v181
      %483 = vmatprep.subr.mxu0 0.0
      %484 = vmatpush1.msra.mxu0 0.0
      %485 = vmatprep.subr.mxu0 0.0
      %486 = vmatpush1.msra.mxu0 0.0
      %487 = vmatprep.subr.mxu0 0.0
      %488 = vmatpush1.msra.mxu0 0.0
      %489 = vmatprep.subr.mxu0 0.0
      %490 = vmatpush1.msra.mxu0 0.0
      %491 = vmatprep.subr.mxu0 0.0
      %492 = vmatpush1.msra.mxu0 0.0
      %493 = vmatprep.subr.mxu0 0.0
      %494 = vmatpush1.msra.mxu0 0.0
      %495 = vmatprep.subr.mxu0 0.0
      %496 = vmatpush1.msra.mxu0 0.0
      %497 = vmatprep.subr.mxu0 0.0
      %498 = vmatpush1.msra.mxu0 0.0
      %499 = vmatprep.subr.mxu0 0.0
      %500 = vmatpush1.msra.mxu0 0.0
      %501 = vmatprep.subr.mxu0 0.0
      %502 = vmatpush1.msra.mxu0 0.0
      %503 = vmatprep.subr.mxu0 0.0
      %504 = vmatpush1.msra.mxu0 0.0
      %505 = vmatprep.subr.mxu0 0.0
      %506 = vmatpush1.msra.mxu0 0.0
      %507 = vmatprep.subr.mxu0 0.0
      %508 = vmatpush1.msra.mxu0 0.0
      %509 = vmatprep.subr.mxu0 0.0
      %510 = vmatpush1.msra.mxu0 0.0
      %511 = vmatprep.subr.mxu0 0.0
      %512 = vmatpush1.msra.mxu0 0.0
      %513 = vmatprep.subr.mxu0 0.0
      %514 = vmatpush1.msra.mxu0 0.0
      %515 = vmatprep.subr.mxu0 0.0
      %516 = vmatpush1.msra.mxu0 0.0
      %517 = vmatprep.subr.mxu0 0.0
      %518 = vmatpush1.msra.mxu0 0.0
      %519 = vmatprep.subr.mxu0 0.0
      %520 = vmatpush1.msra.mxu0 0.0
      %521 = vmatprep.subr.mxu0 0.0
      %522 = vmatpush1.msra.mxu0 0.0
      %523 = vmatprep.subr.mxu0 0.0
      %524 = vmatpush1.msra.mxu0 0.0
      %525 = vmatprep.subr.mxu0 0.0
      %526 = vmatpush1.msra.mxu0 0.0
      %527 = vmatprep.subr.mxu0 0.0
      %528 = vmatpush1.msra.mxu0 0.0
      %529 = vmatprep.subr.mxu0 0.0
      %530 = vmatpush1.msra.mxu0 0.0
      %531 = vmatprep.subr.mxu0 0.0
      %532 = vmatpush1.msra.mxu0 0.0
      %533 = vmatprep.subr.mxu0 0.0
      %534 = vmatpush1.msra.mxu0 0.0
      %535 = vmatprep.subr.mxu0 0.0
      %536 = vmatpush1.msra.mxu0 0.0
      %537 = vmatprep.subr.mxu0 0.0
      %538 = vmatpush1.msra.mxu0 0.0
      %539 = vmatprep.subr.mxu0 0.0
      %540 = vmatpush1.msra.mxu0 0.0
      %541 = vmatprep.subr.mxu0 0.0
      %542 = vmatpush1.msra.mxu0 0.0
      %543 = vmatprep.subr.mxu0 0.0
      %544 = vmatpush1.msra.mxu0 0.0
      %545 = vmatprep.mubr.f32.mxu0 0.0
      %546 = vmatmul.mubr.f32.gmra.mrb[0].mxu0 %v479
      %v547 = vpop.f32.mrb[0].mxu0
      %v548 = vadd.f32 0.0, %v547
      %v549 = vpop.f32.mrb[0].mxu0
      %550 = vdwg.mxu0
      %v552 = vsel %vm185, %v174, 0
      %554 = vmatprep.subr.mxu0 0.0
      %555 = vmatpush1.msra.mxu0 %v182
      %556 = vmatprep.subr.mxu0 0.0
      %557 = vmatpush1.msra.mxu0 0.0
      %558 = vmatprep.subr.mxu0 0.0
      %559 = vmatpush1.msra.mxu0 0.0
      %560 = vmatprep.subr.mxu0 0.0
      %561 = vmatpush1.msra.mxu0 0.0
      %562 = vmatprep.subr.mxu0 0.0
      %563 = vmatpush1.msra.mxu0 0.0
      %564 = vmatprep.subr.mxu0 0.0
      %565 = vmatpush1.msra.mxu0 0.0
      %566 = vmatprep.subr.mxu0 0.0
      %567 = vmatpush1.msra.mxu0 0.0
      %568 = vmatprep.subr.mxu0 0.0
      %569 = vmatpush1.msra.mxu0 0.0
      %570 = vmatprep.subr.mxu0 0.0
      %571 = vmatpush1.msra.mxu0 0.0
      %572 = vmatprep.subr.mxu0 0.0
      %573 = vmatpush1.msra.mxu0 0.0
      %574 = vmatprep.subr.mxu0 0.0
      %575 = vmatpush1.msra.mxu0 0.0
      %576 = vmatprep.subr.mxu0 0.0
      %577 = vmatpush1.msra.mxu0 0.0
      %578 = vmatprep.subr.mxu0 0.0
      %579 = vmatpush1.msra.mxu0 0.0
      %580 = vmatprep.subr.mxu0 0.0
      %581 = vmatpush1.msra.mxu0 0.0
      %582 = vmatprep.subr.mxu0 0.0
      %583 = vmatpush1.msra.mxu0 0.0
      %584 = vmatprep.subr.mxu0 0.0
      %585 = vmatpush1.msra.mxu0 0.0
      %586 = vmatprep.subr.mxu0 0.0
      %587 = vmatpush1.msra.mxu0 0.0
      %588 = vmatprep.subr.mxu0 0.0
      %589 = vmatpush1.msra.mxu0 0.0
      %590 = vmatprep.subr.mxu0 0.0
      %591 = vmatpush1.msra.mxu0 0.0
      %592 = vmatprep.subr.mxu0 0.0
      %593 = vmatpush1.msra.mxu0 0.0
      %594 = vmatprep.subr.mxu0 0.0
      %595 = vmatpush1.msra.mxu0 0.0
      %596 = vmatprep.subr.mxu0 0.0
      %597 = vmatpush1.msra.mxu0 0.0
      %598 = vmatprep.subr.mxu0 0.0
      %599 = vmatpush1.msra.mxu0 0.0
      %600 = vmatprep.subr.mxu0 0.0
      %601 = vmatpush1.msra.mxu0 0.0
      %602 = vmatprep.subr.mxu0 0.0
      %603 = vmatpush1.msra.mxu0 0.0
      %604 = vmatprep.subr.mxu0 0.0
      %605 = vmatpush1.msra.mxu0 0.0
      %606 = vmatprep.subr.mxu0 0.0
      %607 = vmatpush1.msra.mxu0 0.0
      %608 = vmatprep.subr.mxu0 0.0
      %609 = vmatpush1.msra.mxu0 0.0
      %610 = vmatprep.subr.mxu0 0.0
      %611 = vmatpush1.msra.mxu0 0.0
      %612 = vmatprep.subr.mxu0 0.0
      %613 = vmatpush1.msra.mxu0 0.0
      %614 = vmatprep.subr.mxu0 0.0
      %615 = vmatpush1.msra.mxu0 0.0
      %616 = vmatprep.subr.mxu0 0.0
      %617 = vmatpush1.msra.mxu0 0.0
      %618 = vmatprep.mubr.f32.mxu0 0.0
      %619 = vmatmul.mubr.f32.gmra.mrb[0].mxu0 %v552
      %v620 = vpop.f32.mrb[0].mxu0
      %v621 = vadd.f32 0.0, %v620
      %v622 = vpop.f32.mrb[0].mxu0
      %623 = vdwg.mxu0
      %v625 = vsel %vm185, %v175, 0
      %627 = vmatprep.subr.mxu0 0.0
      %628 = vmatpush1.msra.mxu0 %v183
      %629 = vmatprep.subr.mxu0 0.0
      %630 = vmatpush1.msra.mxu0 0.0
      %631 = vmatprep.subr.mxu0 0.0
      %632 = vmatpush1.msra.mxu0 0.0
      %633 = vmatprep.subr.mxu0 0.0
      %634 = vmatpush1.msra.mxu0 0.0
      %635 = vmatprep.subr.mxu0 0.0
      %636 = vmatpush1.msra.mxu0 0.0
      %637 = vmatprep.subr.mxu0 0.0
      %638 = vmatpush1.msra.mxu0 0.0
      %639 = vmatprep.subr.mxu0 0.0
      %640 = vmatpush1.msra.mxu0 0.0
      %641 = vmatprep.subr.mxu0 0.0
      %642 = vmatpush1.msra.mxu0 0.0
      %643 = vmatprep.subr.mxu0 0.0
      %644 = vmatpush1.msra.mxu0 0.0
      %645 = vmatprep.subr.mxu0 0.0
      %646 = vmatpush1.msra.mxu0 0.0
      %647 = vmatprep.subr.mxu0 0.0
      %648 = vmatpush1.msra.mxu0 0.0
      %649 = vmatprep.subr.mxu0 0.0
      %650 = vmatpush1.msra.mxu0 0.0
      %651 = vmatprep.subr.mxu0 0.0
      %652 = vmatpush1.msra.mxu0 0.0
      %653 = vmatprep.subr.mxu0 0.0
      %654 = vmatpush1.msra.mxu0 0.0
      %655 = vmatprep.subr.mxu0 0.0
      %656 = vmatpush1.msra.mxu0 0.0
      %657 = vmatprep.subr.mxu0 0.0
      %658 = vmatpush1.msra.mxu0 0.0
      %659 = vmatprep.subr.mxu0 0.0
      %660 = vmatpush1.msra.mxu0 0.0
      %661 = vmatprep.subr.mxu0 0.0
      %662 = vmatpush1.msra.mxu0 0.0
      %663 = vmatprep.subr.mxu0 0.0
      %664 = vmatpush1.msra.mxu0 0.0
      %665 = vmatprep.subr.mxu0 0.0
      %666 = vmatpush1.msra.mxu0 0.0
      %667 = vmatprep.subr.mxu0 0.0
      %668 = vmatpush1.msra.mxu0 0.0
      %669 = vmatprep.subr.mxu0 0.0
      %670 = vmatpush1.msra.mxu0 0.0
      %671 = vmatprep.subr.mxu0 0.0
      %672 = vmatpush1.msra.mxu0 0.0
      %673 = vmatprep.subr.mxu0 0.0
      %674 = vmatpush1.msra.mxu0 0.0
      %675 = vmatprep.subr.mxu0 0.0
      %676 = vmatpush1.msra.mxu0 0.0
      %677 = vmatprep.subr.mxu0 0.0
      %678 = vmatpush1.msra.mxu0 0.0
      %679 = vmatprep.subr.mxu0 0.0
      %680 = vmatpush1.msra.mxu0 0.0
      %681 = vmatprep.subr.mxu0 0.0
      %682 = vmatpush1.msra.mxu0 0.0
      %683 = vmatprep.subr.mxu0 0.0
      %684 = vmatpush1.msra.mxu0 0.0
      %685 = vmatprep.subr.mxu0 0.0
      %686 = vmatpush1.msra.mxu0 0.0
      %687 = vmatprep.subr.mxu0 0.0
      %688 = vmatpush1.msra.mxu0 0.0
      %689 = vmatprep.subr.mxu0 0.0
      %690 = vmatpush1.msra.mxu0 0.0
      %691 = vmatprep.mubr.f32.mxu0 0.0
      %692 = vmatmul.mubr.f32.gmra.mrb[0].mxu0 %v625
      %v693 = vpop.f32.mrb[0].mxu0
      %v694 = vadd.f32 0.0, %v693
      %v695 = vpop.f32.mrb[0].mxu0
      %696 = vdwg.mxu0
      %v698 = vsel %vm185, %v176, 0
      %700 = vmatprep.subr.mxu0 0.0
      %701 = vmatpush1.msra.mxu0 %v184
      %702 = vmatprep.subr.mxu0 0.0
      %703 = vmatpush1.msra.mxu0 0.0
      %704 = vmatprep.subr.mxu0 0.0
      %705 = vmatpush1.msra.mxu0 0.0
      %706 = vmatprep.subr.mxu0 0.0
      %707 = vmatpush1.msra.mxu0 0.0
      %708 = vmatprep.subr.mxu0 0.0
      %709 = vmatpush1.msra.mxu0 0.0
      %710 = vmatprep.subr.mxu0 0.0
      %711 = vmatpush1.msra.mxu0 0.0
      %712 = vmatprep.subr.mxu0 0.0
      %713 = vmatpush1.msra.mxu0 0.0
      %714 = vmatprep.subr.mxu0 0.0
      %715 = vmatpush1.msra.mxu0 0.0
      %716 = vmatprep.subr.mxu0 0.0
      %717 = vmatpush1.msra.mxu0 0.0
      %718 = vmatprep.subr.mxu0 0.0
      %719 = vmatpush1.msra.mxu0 0.0
      %720 = vmatprep.subr.mxu0 0.0
      %721 = vmatpush1.msra.mxu0 0.0
      %722 = vmatprep.subr.mxu0 0.0
      %723 = vmatpush1.msra.mxu0 0.0
      %724 = vmatprep.subr.mxu0 0.0
      %725 = vmatpush1.msra.mxu0 0.0
      %726 = vmatprep.subr.mxu0 0.0
      %727 = vmatpush1.msra.mxu0 0.0
      %728 = vmatprep.subr.mxu0 0.0
      %729 = vmatpush1.msra.mxu0 0.0
      %730 = vmatprep.subr.mxu0 0.0
      %731 = vmatpush1.msra.mxu0 0.0
      %732 = vmatprep.subr.mxu0 0.0
      %733 = vmatpush1.msra.mxu0 0.0
      %734 = vmatprep.subr.mxu0 0.0
      %735 = vmatpush1.msra.mxu0 0.0
      %736 = vmatprep.subr.mxu0 0.0
      %737 = vmatpush1.msra.mxu0 0.0
      %738 = vmatprep.subr.mxu0 0.0
      %739 = vmatpush1.msra.mxu0 0.0
      %740 = vmatprep.subr.mxu0 0.0
      %741 = vmatpush1.msra.mxu0 0.0
      %742 = vmatprep.subr.mxu0 0.0
      %743 = vmatpush1.msra.mxu0 0.0
      %744 = vmatprep.subr.mxu0 0.0
      %745 = vmatpush1.msra.mxu0 0.0
      %746 = vmatprep.subr.mxu0 0.0
      %747 = vmatpush1.msra.mxu0 0.0
      %748 = vmatprep.subr.mxu0 0.0
      %749 = vmatpush1.msra.mxu0 0.0
      %750 = vmatprep.subr.mxu0 0.0
      %751 = vmatpush1.msra.mxu0 0.0
      %752 = vmatprep.subr.mxu0 0.0
      %753 = vmatpush1.msra.mxu0 0.0
      %754 = vmatprep.subr.mxu0 0.0
      %755 = vmatpush1.msra.mxu0 0.0
      %756 = vmatprep.subr.mxu0 0.0
      %757 = vmatpush1.msra.mxu0 0.0
      %758 = vmatprep.subr.mxu0 0.0
      %759 = vmatpush1.msra.mxu0 0.0
      %760 = vmatprep.subr.mxu0 0.0
      %761 = vmatpush1.msra.mxu0 0.0
      %762 = vmatprep.subr.mxu0 0.0
      %763 = vmatpush1.msra.mxu0 0.0
      %764 = vmatprep.mubr.f32.mxu0 0.0
      %765 = vmatmul.mubr.f32.gmra.mrb[0].mxu0 %v698
      %v766 = vpop.f32.mrb[0].mxu0
      %v767 = vadd.f32 0.0, %v766
      %v768 = vpop.f32.mrb[0].mxu0
      %769 = vdwg.mxu0
      %vm770 = vcmask 60416
      %771 = vst.msk [vmem:[%s167] sm:$0xf] %vm770, %v256
      %772 = vst.msk [vmem:[%s167 + $0x4] sm:$0xf] %vm770, %v329
      %773 = vst.msk [vmem:[%s167 + $0x8] sm:$0xf] %vm770, %v402
      %774 = vst.msk [vmem:[%s167 + $0xc] sm:$0xf] %vm770, %v475
      %775 = vst.msk [vmem:[%s167 + $0x10] sm:$0xf] %vm770, %v548
      %776 = vst.msk [vmem:[%s167 + $0x14] sm:$0xf] %vm770, %v621
      %777 = vst.msk [vmem:[%s167 + $0x18] sm:$0xf] %vm770, %v694
      %778 = vst.msk [vmem:[%s167 + $0x1c] sm:$0xf] %vm770, %v767
      %s779 = smul.u32 8, %s13
      %p780 = scmp.lt.s32.totalorder %s779, 15
      %s781 = scalar_select %p780, %s779, 15
      %s782 = smul.addr %s781, 4
      %s783 = scalar_lea.vmem %s2, %s782
      // Predicated region
      $region29: #{tpu_custom_call.1} parent=27 // pred_check
        %p784 = pneg %p83
      $region30: #{tpu_custom_call.1} parent=27 // pred_check_branch
        %786 = sbr.rel (%p784) target = $region32
      $region31: #{tpu_custom_call.1} parent=27 // pred_region
        %s787 = smul.u32 8, %s13
      $region32: #{tpu_custom_call.1} parent=27 // pred_fallthru
        _
    $region28: #{tpu_custom_call.1} parent=5 // pred_fallthru
      _
    %p788 = scmp.le.s32.totalorder 2, %s8
    // Predicated region
    $region33: #{tpu_custom_call.1} parent=5 // pred_check
      %p789 = pneg %p788
    $region34: #{tpu_custom_call.1} parent=5 // pred_check_branch
      %791 = sbr.rel (%p789) target = $region36
    $region35: #{tpu_custom_call.1} parent=5 // pred_region
      %s792 = ssub.s32 %s8, 2
      // Predicated region
      $region37: #{tpu_custom_call.1} parent=35 // pred_check
        %p793 = pneg %p89
      $region38: #{tpu_custom_call.1} parent=35 // pred_check_branch
        %795 = sbr.rel (%p793) target = $region40
      $region39: #{tpu_custom_call.1} parent=35 // pred_region
        %s796 = smul.u32 8, %s14
        %p797 = scmp.lt.s32.totalorder %s796, 15
        %s798 = scalar_select %p797, %s796, 15
        %s799 = smul.addr %s798, 4
        %s800 = scalar_lea.vmem %s2, %s799
      $region40: #{tpu_custom_call.1} parent=35 // pred_fallthru
        _
    $region36: #{tpu_custom_call.1} parent=5 // pred_fallthru
      _
  $region6: #{tpu_custom_call.1} parent=0 // loop_footer
    %s12 = sadd.s32 1, %s8
  $region7: #{tpu_custom_call.1} parent=0 // loop_footer_branch
    %7 = sbr.rel target = $region3
  $region8: #{tpu_custom_call.1} parent=0 // loop_exit
    _

</llo_original>
